<compile_context>
chip_gen: v6e
topology: v6e:2x2x1
jax: 0.10.0
libtpu: 0.0.40
codegen_flags: <defaults>
</compile_context>

<pallas_src>
import functools

import jax
import jax.numpy as jnp
from jax.experimental import pallas as pl
from jax.experimental.pallas import tpu as pltpu


# ---------------------------------------------------------------------------
# Kernel body
# ---------------------------------------------------------------------------
def _layernorm_kernel(*refs, eps, center, scale, inv_nm1):
    # refs = (x_ref, [scale_ref], [center_ref], o_ref)
    idx = 0
    x_ref = refs[idx]; idx += 1
    scale_ref = None
    center_ref = None
    if scale:
        scale_ref = refs[idx]; idx += 1
    if center:
        center_ref = refs[idx]; idx += 1
    o_ref = refs[idx]

    x = x_ref[...].astype(jnp.float32)                        # (tb, F)
    mean = jnp.mean(x, axis=-1, keepdims=True)                # (tb, 1)
    diff = x - mean
    # torch.std default is unbiased (divide by N-1); constant multiply.
    var = jnp.sum(diff * diff, axis=-1, keepdims=True) * jnp.float32(inv_nm1)
    std = jnp.sqrt(var)                                       # (tb, 1)
    # Reciprocal on the (tb, 1) column only, then a VPU multiply over the tile
    # (replaces a full (tb, F) divide).  approx=False keeps exact parity.
    inv = pl.reciprocal(std + jnp.float32(eps), approx=False)
    out = diff * inv
    if scale:
        out = out * scale_ref[...].astype(jnp.float32)        # (1, F) broadcast
    if center:
        out = out + center_ref[...].astype(jnp.float32)       # (1, F) broadcast
    o_ref[...] = out.astype(o_ref.dtype)


# ---------------------------------------------------------------------------
# Tile-size selection
# ---------------------------------------------------------------------------
_VMEM_LIMIT_BYTES = 32 * 1024 * 1024       # safe on v5e / v6e / v7x
_TILE_BUDGET_BYTES = 24 * 1024 * 1024      # leave headroom under the limit


def _choose_block_rows(B, F, dtype):
    itemsize = jnp.dtype(dtype).itemsize
    # Sub-32-bit dtypes pack rows along sublanes: 8 rows (f32), 16 (bf16), 32 (i8).
    row_align = max(8, 32 // max(itemsize, 1))
    # Per-element footprint estimate: double-buffered input + output in the
    # array dtype plus ~4 f32-wide in-kernel temporaries.
    per_elem = 4 * itemsize + 16
    max_rows = max(row_align, _TILE_BUDGET_BYTES // (per_elem * F))
    target = min(1024, max_rows)
    target = max(row_align, (target // row_align) * row_align)
    # No point tiling past the (row-aligned) batch size.
    b_padded = ((B + row_align - 1) // row_align) * row_align
    return min(target, b_padded)


# ---------------------------------------------------------------------------
# Wrapper
# ---------------------------------------------------------------------------
def layer_norm(x, center_param=None, scale_param=None, *, eps=1e-6,
               center=True, scale=False, block_rows=None):
    """x: (B, F).  center_param/scale_param: (F,) arrays, only required when
    the corresponding flag is True (matching the nn.Module's Parameters)."""
    B, F = x.shape
    if block_rows is None:
        block_rows = _choose_block_rows(B, F, x.dtype)

    grid = (pl.cdiv(B, block_rows),)   # partial last block handled by Pallas

    inputs = [x]
    in_specs = [pl.BlockSpec((block_rows, F), lambda i: (i, 0))]
    if scale:
        assert scale_param is not None
        inputs.append(scale_param.reshape(1, F).astype(x.dtype))
        in_specs.append(pl.BlockSpec((1, F), lambda i: (0, 0)))
    if center:
        assert center_param is not None
        inputs.append(center_param.reshape(1, F).astype(x.dtype))
        in_specs.append(pl.BlockSpec((1, F), lambda i: (0, 0)))

    kernel = functools.partial(
        _layernorm_kernel, eps=eps, center=center, scale=scale,
        inv_nm1=1.0 / max(F - 1, 1))

    # TODO(synk): for F < 128 the output stores are lane-masked; a lane-dense
    # repack (folding rows into the lane axis with a segmented reduction)
    # would lift store bandwidth for tiny feature dims but is not done here.
    return pl.pallas_call(
        kernel,
        out_shape=jax.ShapeDtypeStruct((B, F), x.dtype),
        grid_spec=pltpu.PrefetchScalarGridSpec(
            num_scalar_prefetch=0,
            grid=grid,
            in_specs=in_specs,
            out_specs=pl.BlockSpec((block_rows, F), lambda i: (i, 0)),
        ),
        compiler_params=pltpu.CompilerParams(
            dimension_semantics=("parallel",),
            vmem_limit_bytes=_VMEM_LIMIT_BYTES),
    )(*inputs)


# ---------------------------------------------------------------------------
# Pure-JAX reference
# ---------------------------------------------------------------------------
def layer_norm_ref(x, center_param=None, scale_param=None, *, eps=1e-6,
                   center=True, scale=False):
    x32 = x.astype(jnp.float32)
    mean = jnp.mean(x32, axis=-1, keepdims=True)
    diff = x32 - mean
    var = jnp.sum(diff * diff, axis=-1, keepdims=True) / max(x.shape[-1] - 1, 1)
    std = jnp.sqrt(var)
    out = diff / (std + eps)
    if scale:
        out = out * scale_param.astype(jnp.float32)
    if center:
        out = out + center_param.astype(jnp.float32)
    return out.astype(x.dtype)


if __name__ == "__main__":
    key = jax.random.PRNGKey(0)

    # --- Test 1: small 1D LayerNorm matching the module defaults -----------
    B, F = 8, 32
    x = jax.random.normal(key, (B, F), dtype=jnp.float32)
    # nn.Module.__init__: center=True -> zeros(features); scale=False -> None
    center_param = jnp.zeros((F,), dtype=jnp.float32)

    out = layer_norm(x, center_param=center_param,
                     eps=1e-6, center=True, scale=False)
    out = jax.block_until_ready(out)
    ref = layer_norm_ref(x, center_param=center_param,
                         eps=1e-6, center=True, scale=False)
    assert out.shape == x.shape and out.dtype == x.dtype
    assert jnp.allclose(out, ref, atol=1e-5, rtol=1e-5), "mismatch (test 1)"

    # --- Test 2: non-multiple batch + partial last block + scale=True ------
    B2, F2 = 300, 128
    k1, k2, k3 = jax.random.split(jax.random.PRNGKey(0), 3)
    x2 = jax.random.normal(k1, (B2, F2), dtype=jnp.float32)
    center2 = 0.1 * jax.random.normal(k2, (F2,), dtype=jnp.float32)
    scale2 = 1.0 + 0.1 * jax.random.normal(k3, (F2,), dtype=jnp.float32)

    out2 = layer_norm(x2, center_param=center2, scale_param=scale2,
                      eps=1e-6, center=True, scale=True, block_rows=128)
    out2 = jax.block_until_ready(out2)
    ref2 = layer_norm_ref(x2, center_param=center2, scale_param=scale2,
                          eps=1e-6, center=True, scale=True)
    assert out2.shape == x2.shape
    assert jnp.allclose(out2, ref2, atol=1e-5, rtol=1e-5), "mismatch (test 2)"

    print("KERNEL_OK")
</pallas_src>

<mosaic_0001>
module attributes {stable_mosaic.version = 11 : i64} {
  func.func @_layernorm_kernel(%arg0: i32, %arg1: memref<8x32xf32, #tpu.memory_space<vmem>>, %arg2: memref<1x32xf32, #tpu.memory_space<vmem>>, %arg3: memref<8x32xf32, #tpu.memory_space<vmem>>) attributes {dimension_semantics = [#tpu.dimension_semantics<parallel>], iteration_bounds = array<i64: 1>, scalar_prefetch = 0 : i64, scratch_operands = 0 : i64, tpu.core_type = #tpu.core_type<tc>, window_params = [{transform_indices = @transform_0, window_bounds = array<i64: 8, 32>}, {pipeline_mode = #tpu.pipeline_mode<synchronous>, transform_indices = @transform_1, window_bounds = array<i64: 1, 32>}, {transform_indices = @transform_2, window_bounds = array<i64: 8, 32>}]} {
    %c0 = arith.constant 0 : index
    %c0_0 = arith.constant 0 : index
    %0 = vector.load %arg1[%c0, %c0_0] : memref<8x32xf32, #tpu.memory_space<vmem>>, vector<8x32xf32>
    %cst = arith.constant dense<0.000000e+00> : vector<8xf32>
    %1 = vector.multi_reduction <add>, %0, %cst [1] : vector<8x32xf32> to vector<8xf32>
    %2 = vector.shape_cast %1 : vector<8xf32> to vector<8x1xf32>
    %cst_1 = arith.constant 3.200000e+01 : f32
    %3 = vector.broadcast %cst_1 : f32 to vector<8x1xf32>
    %4 = arith.divf %2, %3 : vector<8x1xf32>
    %5 = vector.broadcast %4 : vector<8x1xf32> to vector<8x32xf32>
    %6 = arith.subf %0, %5 : vector<8x32xf32>
    %7 = arith.mulf %6, %6 : vector<8x32xf32>
    %cst_2 = arith.constant dense<0.000000e+00> : vector<8xf32>
    %8 = vector.multi_reduction <add>, %7, %cst_2 [1] : vector<8x32xf32> to vector<8xf32>
    %9 = vector.shape_cast %8 : vector<8xf32> to vector<8x1xf32>
    %cst_3 = arith.constant 0.0322580636 : f32
    %10 = vector.broadcast %cst_3 : f32 to vector<8x1xf32>
    %11 = arith.mulf %9, %10 : vector<8x1xf32>
    %12 = math.sqrt %11 : vector<8x1xf32>
    %cst_4 = arith.constant 9.99999997E-7 : f32
    %13 = vector.broadcast %cst_4 : f32 to vector<8x1xf32>
    %14 = arith.addf %12, %13 : vector<8x1xf32>
    %15 = tpu.reciprocal %14 : vector<8x1xf32> -> vector<8x1xf32>
    %16 = vector.broadcast %15 : vector<8x1xf32> to vector<8x32xf32>
    %17 = arith.mulf %6, %16 : vector<8x32xf32>
    %c0_5 = arith.constant 0 : index
    %c0_6 = arith.constant 0 : index
    %18 = vector.load %arg2[%c0_5, %c0_6] : memref<1x32xf32, #tpu.memory_space<vmem>>, vector<1x32xf32>
    %19 = vector.broadcast %18 : vector<1x32xf32> to vector<8x32xf32>
    %20 = arith.addf %17, %19 : vector<8x32xf32>
    %c0_7 = arith.constant 0 : index
    %c0_8 = arith.constant 0 : index
    %21 = vector.load %arg3[%c0_7, %c0_8] : memref<8x32xf32, #tpu.memory_space<vmem>>, vector<8x32xf32>
    tpu.vector_store %arg3[%c0_7, %c0_8], %20 {strides = array<i32>} : memref<8x32xf32, #tpu.memory_space<vmem>>, vector<8x32xf32>,
    return
  }
  func.func @transform_0(%arg0: i32) -> (i32, i32) {
    %c0_i32 = arith.constant 0 : i32
    %c0_i32_0 = arith.constant 0 : i32
    return %arg0, %c0_i32 : i32, i32
  }
  func.func @transform_1(%arg0: i32) -> (i32, i32) {
    %c0_i32 = arith.constant 0 : i32
    %c0_i32_0 = arith.constant 0 : i32
    %c0_i32_1 = arith.constant 0 : i32
    return %c0_i32, %c0_i32_0 : i32, i32
  }
  func.func @transform_2(%arg0: i32) -> (i32, i32) {
    %c0_i32 = arith.constant 0 : i32
    %c0_i32_0 = arith.constant 0 : i32
    return %arg0, %c0_i32 : i32, i32
  }
}

</mosaic_0001>

<llo_original>
// kernel: tpu_custom_call.1
$region0: #{tpu_custom_call.1}
  #allocation0 [shape = 'u32[]', space=smem, size = 0x4, offset = 0x4, fixed_abs, tag = 'smem constant byte address 0x4 - core index']
  #allocation1 [shape = 'u32[144,128]{1,0:T(1,128)}', space=vmem, size = 0x12000, scoped, tag = 'internal scratch']
  %s0 = inlined_call_operand.hbm [shape: f32[8,32], index: 0, kind: input, shape index: {}]
  %s1 = inlined_call_operand.vmem [shape: f32[1,32], index: 1, kind: input, shape index: {}]
  %s2 = inlined_call_operand.hbm [shape: f32[8,32], index: 2, kind: output, shape index: {}]
  %s3 = sld [smem:[#allocation0]]
  $region22: #{tpu_custom_call.1} parent=0
    _
  %s5 = ssub.s32 1, %s3
  %s6 = scalar_select 0, %s5, %s3
  $region1: #{tpu_custom_call.1} parent=0
    #allocation2 [shape = 'u8[4096]{0}', space=vmem, size = 0x1000, scoped, tag = 'input window, operand 0, single buffered']
    #allocation3 [shape = 's32[1]{0}', space=sflag, size = 0x4, scoped, tag = 'scoped memory for tpu_custom_call.1']
    #allocation4 [shape = 's32[1]{0}', space=sflag, size = 0x4, scoped, tag = 'scoped memory for tpu_custom_call.1']
    #allocation5 [shape = 'u8[4096]{0}', space=vmem, size = 0x1000, scoped, tag = 'output window, operand 0, single buffered']
    %7 = vsyncpa [#allocation3], 0
    %8 = vsyncpa [#allocation4], 0
    // Predicated region
    $region2: #{tpu_custom_call.1} parent=1 // pred_check
      _
    $region3: #{tpu_custom_call.1} parent=1 // pred_check_branch
      %10 = sbr.rel (0) target = $region5
    $region4: #{tpu_custom_call.1} parent=1 // pred_region
      %s12 = ssub.s32 128, 128
      %13 = vsyncadd [#allocation3], %s12
      %s15 = sshll.u32 [#allocation2], 4
      %s16 = int_to_ptr.vmem [resolvable:$true] %s15
      %18 = dma.hbm_to_vmem [thread:$0]  %s0, 128, %s16, [#allocation3]
    $region5: #{tpu_custom_call.1} parent=1 // pred_fallthru
      _
    // Predicated region
    $region6: #{tpu_custom_call.1} parent=1 // pred_check
      _
    $region7: #{tpu_custom_call.1} parent=1 // pred_check_branch
      %20 = sbr.rel (0) target = $region9
    $region8: #{tpu_custom_call.1} parent=1 // pred_region
      _
    $region9: #{tpu_custom_call.1} parent=1 // pred_fallthru
      _
    // Predicated region
    $region10: #{tpu_custom_call.1} parent=1 // pred_check
      _
    $region11: #{tpu_custom_call.1} parent=1 // pred_check_branch
      %22 = sbr.rel (0) target = $region13
    $region12: #{tpu_custom_call.1} parent=1 // pred_region
      %23 = dma.done [#allocation3], 128
    $region13: #{tpu_custom_call.1} parent=1 // pred_fallthru
      _
    %v24 = vld [vmem:[#allocation2] sm:$0xff]
    %vm25 = vcmask 261120
    %v26 = vsel %vm25, %v24, 0.0
    %27 = vadd.xlane.f32.xlu0 %v26
    %v28 = vpop.xlane.xlu0 %27
    %v29 = vrcp.pop 32.0
    %v30 = vmul.f32 %v28, %v29
    %v31 = vsub.f32 %v24, %v30
    %v32 = vmul.f32 %v31, %v31
    %v33 = vsel %vm25, %v32, 0.0
    %34 = vadd.xlane.f32.xlu0 %v33
    %v35 = vpop.xlane.xlu0 %34
    %v36 = vmul.f32 %v35, 0.032258064
    %v37 = vrsqrt.pop %v36
    %v38 = vmul.f32 %v36, %v37
    %vm39 = vcmp.eq.f32.partialorder %v36, inf
    %v40 = vsel %vm39, %v36, %v38
    %vm41 = vcmp.eq.f32.partialorder %v36, 0.0
    %v42 = vand.u32 %v36, 2147483648
    %v43 = vsel %vm41, %v42, %v40
    %v44 = vadd.f32 %v43, 1e-06
    %v45 = vrcp.pop %v44
    %v46 = vmul.f32 %v31, %v45
    %v47 = vld [vmem:[%s1] sm:$0x1]
    %v49 = vlaneseq
    %v50 = vshrl.u32 %v49, 7
    %v51 = vsub.s32 0, %v50
    %v52 = vrot.slane %v47, %v51
    %v54 = vadd.f32 %v46, %v52
    %55 = vst.msk [vmem:[#allocation5] sm:$0xff] %vm25, %v54
    // Predicated region
    $region14: #{tpu_custom_call.1} parent=1 // pred_check
      _
    $region15: #{tpu_custom_call.1} parent=1 // pred_check_branch
      %57 = sbr.rel (0) target = $region17
    $region16: #{tpu_custom_call.1} parent=1 // pred_region
      %s59 = ssub.s32 128, 128
      %60 = vsyncadd [#allocation4], %s59
      %s62 = sshll.u32 [#allocation5], 4
      %s63 = int_to_ptr.vmem [resolvable:$true] %s62
      %65 = dma.vmem_to_hbm [thread:$0]  %s63, 128, %s2, [#allocation4]
    $region17: #{tpu_custom_call.1} parent=1 // pred_fallthru
      _
    // Predicated region
    $region18: #{tpu_custom_call.1} parent=1 // pred_check
      _
    $region19: #{tpu_custom_call.1} parent=1 // pred_check_branch
      %67 = sbr.rel (0) target = $region21
    $region20: #{tpu_custom_call.1} parent=1 // pred_region
      %68 = dma.done [#allocation4], 128
    $region21: #{tpu_custom_call.1} parent=1 // pred_fallthru
      _
    %69 = vsyncpa [#allocation3], 1
    %70 = vsyncpa [#allocation4], 1

</llo_original>
